<compile_context>
chip_gen: v7x
topology: tpu7x:2x2x1
jax: 0.10.0
libtpu: 0.0.40
codegen_flags: <defaults>
</compile_context>

<pallas_src>
import functools

import jax
import jax.numpy as jnp
from jax.experimental import pallas as pl
from jax.experimental.pallas import tpu as pltpu


def _mlp_kernel(x_ref, w1_ref, b1_ref, w2_ref, b2_ref, o_ref, acc_ref):
    # x_ref:  (tm, Ci_pad)        (mm dtype)
    # w1_ref: (Ci_pad, th)        (mm dtype)
    # b1_ref: (1, th)             f32
    # w2_ref: (th, Co_pad)        (mm dtype)
    # b2_ref: (1, Co_pad)         f32
    # o_ref:  (tm, Co_pad)        out dtype
    # acc_ref:(tm, Co_pad)        f32 accumulator scratch (persists across grid)
    h_idx = pl.program_id(1)

    @pl.when(h_idx == 0)
    def _init():
        acc_ref[...] = jnp.zeros_like(acc_ref)

    # fc1 partial (this hidden chunk), f32 accumulation on the MXU.
    h = jnp.dot(x_ref[...], w1_ref[...], preferred_element_type=jnp.float32)
    h = h + b1_ref[...]

    # Exact (erf-based) GELU in f32, matching torch.nn.GELU() default.
    # TODO(synk): tanh-approx GELU would use the (idle) EUP slot, but changes
    # numerics vs torch's exact-erf default, so keep erf.
    h = 0.5 * h * (1.0 + jax.lax.erf(h * jnp.float32(0.7071067811865476)))

    # fc2 partial product, accumulated across hidden chunks.
    acc_ref[...] += jnp.dot(h.astype(w2_ref.dtype), w2_ref[...],
                            preferred_element_type=jnp.float32)

    @pl.when(h_idx == pl.num_programs(1) - 1)
    def _finalize():
        o_ref[...] = (acc_ref[...] + b2_ref[...]).astype(o_ref.dtype)


def _round_up(x, m):
    return (x + m - 1) // m * m


def _pad2d(a, rows, cols):
    pr, pc = rows - a.shape[0], cols - a.shape[1]
    if pr or pc:
        a = jnp.pad(a, ((0, pr), (0, pc)))
    return a


@functools.partial(jax.jit, static_argnames=("tm", "th", "matmul_dtype"))
def mlp_forward(x, w1, b1, w2, b2, *, tm=256, th=512, matmul_dtype=None):
    """Fused MLP forward (fc1 -> exact GELU -> fc2).

    x:  (B, N, C_in)
    w1: (C_in, H), b1: (H,)     (weights stored transposed vs torch Linear)
    w2: (H, C_out), b2: (C_out,)
    tm: row tile (rounded to a multiple of 128)
    th: hidden-dim tile (rounded to a multiple of 128)
    matmul_dtype: e.g. jnp.bfloat16 to run the MXU in bf16 (f32 accumulation).
    """
    B, N, C_in = x.shape
    H = w1.shape[1]
    C_out = w2.shape[1]
    M = B * N
    out_dtype = x.dtype
    mm_dtype = jnp.dtype(matmul_dtype) if matmul_dtype is not None else jnp.dtype(x.dtype)

    # --- tile sizes / padded dims (lane- and sublane-aligned) ---------------
    tm_eff = _round_up(min(tm, M), 128)
    th_eff = _round_up(min(th, H), 128)
    M_pad = _round_up(M, tm_eff)
    H_pad = _round_up(H, th_eff)
    Ci_pad = _round_up(C_in, 128)
    Co_pad = _round_up(C_out, 128)
    n_m = M_pad // tm_eff
    n_h = H_pad // th_eff

    # --- operand prep: flatten, cast, zero-pad ------------------------------
    # Zero padding is semantics-preserving: padded K columns/rows contribute
    # exactly 0, padded hidden units give GELU(0)=0, padded rows/outputs are
    # sliced off below.
    x2d = _pad2d(x.reshape(M, C_in).astype(mm_dtype), M_pad, Ci_pad)
    w1p = _pad2d(w1.astype(mm_dtype), Ci_pad, H_pad)
    w2p = _pad2d(w2.astype(mm_dtype), H_pad, Co_pad)
    b1p = _pad2d(b1.astype(jnp.float32).reshape(1, H), 1, H_pad)
    b2p = _pad2d(b2.astype(jnp.float32).reshape(1, C_out), 1, Co_pad)

    # --- explicit VMEM budget from the actual tile footprint ----------------
    mm_b = jnp.dtype(mm_dtype).itemsize
    out_b = jnp.dtype(out_dtype).itemsize
    w_buf = 1 if n_h == 1 else 2  # resident weights are single-buffered
    footprint = (
        tm_eff * Ci_pad * mm_b * 2           # x tile (double buffered)
        + Ci_pad * th_eff * mm_b * w_buf     # W1 block
        + th_eff * 4 * w_buf                 # b1 block
        + th_eff * Co_pad * mm_b * w_buf     # W2 block
        + Co_pad * 4                         # b2
        + tm_eff * Co_pad * out_b * 2        # out tile (double buffered)
        + tm_eff * Co_pad * 4                # f32 accumulator scratch
        + tm_eff * th_eff * 4 * 2            # fc1 / GELU intermediates
    )
    vmem_limit = int(min(max(2 * footprint + (8 << 20), 32 << 20), 64 << 20))

    # Blocks with a constant index map are resident for the whole grid:
    # single-buffer them so they don't pay 2x VMEM for nothing.
    def _spec(shape, index_map, constant):
        if constant:
            return pl.BlockSpec(shape, index_map, pipeline_mode=pl.Buffered(1))
        return pl.BlockSpec(shape, index_map)

    weights_resident = n_h == 1

    out2d = pl.pallas_call(
        _mlp_kernel,
        out_shape=jax.ShapeDtypeStruct((M_pad, Co_pad), out_dtype),
        grid_spec=pltpu.PrefetchScalarGridSpec(
            num_scalar_prefetch=0,
            grid=(n_m, n_h),
            in_specs=[
                pl.BlockSpec((tm_eff, Ci_pad), lambda i, h: (i, 0)),             # x
                _spec((Ci_pad, th_eff), lambda i, h: (0, h), weights_resident),  # W1
                _spec((1, th_eff), lambda i, h: (0, h), weights_resident),       # b1
                _spec((th_eff, Co_pad), lambda i, h: (h, 0), weights_resident),  # W2
                _spec((1, Co_pad), lambda i, h: (0, 0), True),                   # b2
            ],
            out_specs=pl.BlockSpec((tm_eff, Co_pad), lambda i, h: (i, 0)),
            scratch_shapes=[pltpu.VMEM((tm_eff, Co_pad), jnp.float32)],
        ),
        compiler_params=pltpu.CompilerParams(
            dimension_semantics=("parallel", "arbitrary"),
            vmem_limit_bytes=vmem_limit,
        ),
    )(x2d, w1p, b1p, w2p, b2p)

    return out2d[:M, :C_out].reshape(B, N, C_out)


def init_mlp_params(key, in_features, hidden_features=None, out_features=None,
                    dtype=jnp.float32):
    """Deterministic init matching nn.Linear shapes.
    PyTorch Linear weight is (out, in); we store the transposed (in, out) form
    since the kernel computes x @ W."""
    out_features = out_features or in_features
    hidden_features = hidden_features or in_features
    k1, k2, k3, k4 = jax.random.split(key, 4)
    bound1 = 1.0 / (in_features ** 0.5)
    bound2 = 1.0 / (hidden_features ** 0.5)
    w1 = jax.random.uniform(k1, (in_features, hidden_features), dtype,
                            minval=-bound1, maxval=bound1)
    b1 = jax.random.uniform(k2, (hidden_features,), dtype,
                            minval=-bound1, maxval=bound1)
    w2 = jax.random.uniform(k3, (hidden_features, out_features), dtype,
                            minval=-bound2, maxval=bound2)
    b2 = jax.random.uniform(k4, (out_features,), dtype,
                            minval=-bound2, maxval=bound2)
    return w1, b1, w2, b2


def _mlp_reference(x, w1, b1, w2, b2):
    h = x @ w1 + b1
    h = 0.5 * h * (1.0 + jax.lax.erf(h * 0.7071067811865476))
    return h @ w2 + b2


if __name__ == "__main__":
    key = jax.random.PRNGKey(0)
    kx, kp = jax.random.split(key)

    # Test 1: small ViT-style MLP, f32 end-to-end (exact erf GELU).
    B, N, C, Hdim = 2, 8, 16, 32
    x = jax.random.normal(kx, (B, N, C), dtype=jnp.float32)
    w1, b1, w2, b2 = init_mlp_params(kp, C, Hdim, C)

    out = mlp_forward(x, w1, b1, w2, b2)
    jax.block_until_ready(out)
    ref = _mlp_reference(x, w1, b1, w2, b2)
    assert out.shape == (B, N, C)
    assert jnp.allclose(out, ref, atol=1e-5, rtol=1e-5)

    # Test 2: bf16 matmul operands on the MXU, f32 GELU / accumulation.
    out_bf16 = mlp_forward(x, w1, b1, w2, b2, matmul_dtype=jnp.bfloat16)
    jax.block_until_ready(out_bf16)
    assert jnp.allclose(out_bf16, ref, atol=5e-2, rtol=5e-2)

    # Test 3: exercises hidden-dim tiling (n_h > 1), row padding and
    # feature-dim padding (C=96 -> 128 lanes).
    k2x, k2p = jax.random.split(jax.random.PRNGKey(1))
    B2, N2, C2, H2 = 2, 24, 96, 384
    x2 = jax.random.normal(k2x, (B2, N2, C2), dtype=jnp.float32)
    p2 = init_mlp_params(k2p, C2, H2, C2)
    out2 = mlp_forward(x2, *p2, tm=128, th=128)
    jax.block_until_ready(out2)
    ref2 = _mlp_reference(x2, *p2)
    assert out2.shape == (B2, N2, C2)
    assert jnp.allclose(out2, ref2, atol=1e-4, rtol=1e-4)

    print("KERNEL_OK")
</pallas_src>

<mosaic_0001>
module attributes {stable_mosaic.version = 11 : i64} {
  func.func @_mlp_kernel(%arg0: i32, %arg1: i32, %arg2: memref<128x128xf32, #tpu.memory_space<vmem>>, %arg3: memref<128x128xf32, #tpu.memory_space<vmem>>, %arg4: memref<1x128xf32, #tpu.memory_space<vmem>>, %arg5: memref<128x128xf32, #tpu.memory_space<vmem>>, %arg6: memref<1x128xf32, #tpu.memory_space<vmem>>, %arg7: memref<128x128xf32, #tpu.memory_space<vmem>>, %arg8: memref<128x128xf32, #tpu.memory_space<vmem>>) attributes {dimension_semantics = [#tpu.dimension_semantics<parallel>, #tpu.dimension_semantics<arbitrary>], iteration_bounds = array<i64: 1, 1>, scalar_prefetch = 0 : i64, scratch_operands = 1 : i64, tpu.core_type = #tpu.core_type<tc>, window_params = [{transform_indices = @transform_0, window_bounds = array<i64: 128, 128>}, {pipeline_mode = #tpu.pipeline_mode<synchronous>, transform_indices = @transform_1, window_bounds = array<i64: 128, 128>}, {pipeline_mode = #tpu.pipeline_mode<synchronous>, transform_indices = @transform_2, window_bounds = array<i64: 1, 128>}, {pipeline_mode = #tpu.pipeline_mode<synchronous>, transform_indices = @transform_3, window_bounds = array<i64: 128, 128>}, {pipeline_mode = #tpu.pipeline_mode<synchronous>, transform_indices = @transform_4, window_bounds = array<i64: 1, 128>}, {transform_indices = @transform_5, window_bounds = array<i64: 128, 128>}]} {
    %c0_i32 = arith.constant 0 : i32
    %0 = arith.cmpi eq, %arg1, %c0_i32 : i32
    %1 = arith.extui %0 : i1 to i32
    %c0_i32_0 = arith.constant 0 : i32
    %2 = arith.cmpi ne, %1, %c0_i32_0 : i32
    scf.if %2 {
      %cst_18 = arith.constant 0.000000e+00 : f32
      %25 = vector.broadcast %cst_18 : f32 to vector<128x128xf32>
      %c0_19 = arith.constant 0 : index
      %c0_20 = arith.constant 0 : index
      %26 = vector.load %arg8[%c0_19, %c0_20] : memref<128x128xf32, #tpu.memory_space<vmem>>, vector<128x128xf32>
      tpu.vector_store %arg8[%c0_19, %c0_20], %25 {strides = array<i32>} : memref<128x128xf32, #tpu.memory_space<vmem>>, vector<128x128xf32>,
    } else {
    }
    %c0 = arith.constant 0 : index
    %c0_1 = arith.constant 0 : index
    %3 = vector.load %arg2[%c0, %c0_1] : memref<128x128xf32, #tpu.memory_space<vmem>>, vector<128x128xf32>
    %c0_2 = arith.constant 0 : index
    %c0_3 = arith.constant 0 : index
    %4 = vector.load %arg3[%c0_2, %c0_3] : memref<128x128xf32, #tpu.memory_space<vmem>>, vector<128x128xf32>
    %cst = arith.constant dense<0.000000e+00> : vector<128x128xf32>
    %5 = tpu.matmul %3, %4, %cst {dimension_numbers = #tpu.dot_dimension_numbers<[1], [0], [0], [1], [0, 0, 1, 1], [], []>} : vector<128x128xf32>, vector<128x128xf32>, vector<128x128xf32> -> vector<128x128xf32>
    %c0_4 = arith.constant 0 : index
    %c0_5 = arith.constant 0 : index
    %6 = vector.load %arg4[%c0_4, %c0_5] : memref<1x128xf32, #tpu.memory_space<vmem>>, vector<1x128xf32>
    %7 = vector.broadcast %6 : vector<1x128xf32> to vector<128x128xf32>
    %8 = arith.addf %5, %7 : vector<128x128xf32>
    %cst_6 = arith.constant 5.000000e-01 : f32
    %9 = vector.broadcast %cst_6 : f32 to vector<128x128xf32>
    %10 = arith.mulf %9, %8 : vector<128x128xf32>
    %cst_7 = arith.constant 0.707106769 : f32
    %11 = vector.broadcast %cst_7 : f32 to vector<128x128xf32>
    %12 = arith.mulf %8, %11 : vector<128x128xf32>
    %13 = math.erf %12 : vector<128x128xf32>
    %cst_8 = arith.constant 1.000000e+00 : f32
    %14 = vector.broadcast %cst_8 : f32 to vector<128x128xf32>
    %15 = arith.addf %14, %13 : vector<128x128xf32>
    %16 = arith.mulf %10, %15 : vector<128x128xf32>
    %c0_9 = arith.constant 0 : index
    %c0_10 = arith.constant 0 : index
    %17 = vector.load %arg8[%c0_9, %c0_10] : memref<128x128xf32, #tpu.memory_space<vmem>>, vector<128x128xf32>
    %c0_11 = arith.constant 0 : index
    %c0_12 = arith.constant 0 : index
    %18 = vector.load %arg5[%c0_11, %c0_12] : memref<128x128xf32, #tpu.memory_space<vmem>>, vector<128x128xf32>
    %cst_13 = arith.constant dense<0.000000e+00> : vector<128x128xf32>
    %19 = tpu.matmul %16, %18, %cst_13 {dimension_numbers = #tpu.dot_dimension_numbers<[1], [0], [0], [1], [0, 0, 1, 1], [], []>} : vector<128x128xf32>, vector<128x128xf32>, vector<128x128xf32> -> vector<128x128xf32>
    %20 = arith.addf %17, %19 : vector<128x128xf32>
    %c0_14 = arith.constant 0 : index
    %c0_15 = arith.constant 0 : index
    %21 = vector.load %arg8[%c0_14, %c0_15] : memref<128x128xf32, #tpu.memory_space<vmem>>, vector<128x128xf32>
    tpu.vector_store %arg8[%c0_14, %c0_15], %20 {strides = array<i32>} : memref<128x128xf32, #tpu.memory_space<vmem>>, vector<128x128xf32>,
    %c0_i32_16 = arith.constant 0 : i32
    %22 = arith.cmpi eq, %arg1, %c0_i32_16 : i32
    %23 = arith.extui %22 : i1 to i32
    %c0_i32_17 = arith.constant 0 : i32
    %24 = arith.cmpi ne, %23, %c0_i32_17 : i32
    scf.if %24 {
      %c0_18 = arith.constant 0 : index
      %c0_19 = arith.constant 0 : index
      %25 = vector.load %arg8[%c0_18, %c0_19] : memref<128x128xf32, #tpu.memory_space<vmem>>, vector<128x128xf32>
      %c0_20 = arith.constant 0 : index
      %c0_21 = arith.constant 0 : index
      %26 = vector.load %arg6[%c0_20, %c0_21] : memref<1x128xf32, #tpu.memory_space<vmem>>, vector<1x128xf32>
      %27 = vector.broadcast %26 : vector<1x128xf32> to vector<128x128xf32>
      %28 = arith.addf %25, %27 : vector<128x128xf32>
      %c0_22 = arith.constant 0 : index
      %c0_23 = arith.constant 0 : index
      %29 = vector.load %arg7[%c0_22, %c0_23] : memref<128x128xf32, #tpu.memory_space<vmem>>, vector<128x128xf32>
      tpu.vector_store %arg7[%c0_22, %c0_23], %28 {strides = array<i32>} : memref<128x128xf32, #tpu.memory_space<vmem>>, vector<128x128xf32>,
    } else {
    }
    return
  }
  func.func @transform_0(%arg0: i32, %arg1: i32) -> (i32, i32) {
    %c0_i32 = arith.constant 0 : i32
    %c0_i32_0 = arith.constant 0 : i32
    return %arg0, %c0_i32 : i32, i32
  }
  func.func @transform_1(%arg0: i32, %arg1: i32) -> (i32, i32) {
    %c0_i32 = arith.constant 0 : i32
    %c0_i32_0 = arith.constant 0 : i32
    return %c0_i32, %arg1 : i32, i32
  }
  func.func @transform_2(%arg0: i32, %arg1: i32) -> (i32, i32) {
    %c0_i32 = arith.constant 0 : i32
    %c0_i32_0 = arith.constant 0 : i32
    return %c0_i32, %arg1 : i32, i32
  }
  func.func @transform_3(%arg0: i32, %arg1: i32) -> (i32, i32) {
    %c0_i32 = arith.constant 0 : i32
    %c0_i32_0 = arith.constant 0 : i32
    return %arg1, %c0_i32 : i32, i32
  }
  func.func @transform_4(%arg0: i32, %arg1: i32) -> (i32, i32) {
    %c0_i32 = arith.constant 0 : i32
    %c0_i32_0 = arith.constant 0 : i32
    %c0_i32_1 = arith.constant 0 : i32
    return %c0_i32, %c0_i32_0 : i32, i32
  }
  func.func @transform_5(%arg0: i32, %arg1: i32) -> (i32, i32) {
    %c0_i32 = arith.constant 0 : i32
    %c0_i32_0 = arith.constant 0 : i32
    return %arg0, %c0_i32 : i32, i32
  }
}

</mosaic_0001>

<llo_original>
// kernel: mlp_forward.1
$region0: #{mlp_forward.1}
  #allocation0 [shape = 'u32[]', space=smem, size = 0x4, offset = 0x4, fixed_abs, tag = 'smem constant byte address 0x4 - core index']
  #allocation1 [shape = 'u32[144,128]{1,0:T(1,128)}', space=vmem, size = 0x12000, scoped, tag = 'internal scratch']
  #allocation2 [shape = 'f32[128,128]{1,0:T(8,128)}', space=vmem, size = 0x10000, scoped, tag = 'scratch operand']
  %s0 = inlined_call_operand.vmem [shape: f32[128,128], index: 0, kind: input, shape index: {}]
  %s1 = inlined_call_operand.vmem [shape: f32[128,128], index: 1, kind: input, shape index: {}]
  %s2 = inlined_call_operand.vmem [shape: f32[1,128], index: 2, kind: input, shape index: {}]
  %s3 = inlined_call_operand.vmem [shape: f32[128,128], index: 3, kind: input, shape index: {}]
  %s4 = inlined_call_operand.vmem [shape: f32[1,128], index: 4, kind: input, shape index: {}]
  %s5 = inlined_call_operand.vmem [shape: f32[128,128], index: 5, kind: output, shape index: {}]
  %s6 = sld [smem:[#allocation0]]
  $region38: #{mlp_forward.1} parent=0
    _
  %s8 = ssub.s32 1, %s6
  %s9 = scalar_select 0, %s8, %s6
  // Predicated region
  $region2: #{mlp_forward.1} parent=0 // pred_check
    _
  $region3: #{mlp_forward.1} parent=0 // pred_check_branch
    %11 = sbr.rel (0) target = $region5
  $region4: #{mlp_forward.1} parent=0 // pred_region
    _
  $region5: #{mlp_forward.1} parent=0 // pred_fallthru
    _
  // Predicated region
  $region6: #{mlp_forward.1} parent=0 // pred_check
    _
  $region7: #{mlp_forward.1} parent=0 // pred_check_branch
    %13 = sbr.rel (0) target = $region9
  $region8: #{mlp_forward.1} parent=0 // pred_region
    _
  $region9: #{mlp_forward.1} parent=0 // pred_fallthru
    _
  // Predicated region
  $region10: #{mlp_forward.1} parent=0 // pred_check
    _
  $region11: #{mlp_forward.1} parent=0 // pred_check_branch
    %15 = sbr.rel (0) target = $region13
  $region12: #{mlp_forward.1} parent=0 // pred_region
    _
  $region13: #{mlp_forward.1} parent=0 // pred_fallthru
    _
  // Predicated region
  $region14: #{mlp_forward.1} parent=0 // pred_check
    _
  $region15: #{mlp_forward.1} parent=0 // pred_check_branch
    %17 = sbr.rel (0) target = $region17
  $region16: #{mlp_forward.1} parent=0 // pred_region
    _
  $region17: #{mlp_forward.1} parent=0 // pred_fallthru
    _
  // Predicated region
  $region18: #{mlp_forward.1} parent=0 // pred_check
    _
  $region19: #{mlp_forward.1} parent=0 // pred_check_branch
    %19 = sbr.rel (0) target = $region21
  $region20: #{mlp_forward.1} parent=0 // pred_region
    _
  $region21: #{mlp_forward.1} parent=0 // pred_fallthru
    _
  %p20 = scmp.eq.s32.totalorder 0, 0
  // Predicated region
  $region22: #{mlp_forward.1} parent=0 // pred_check
    %p21 = pneg %p20
  $region23: #{mlp_forward.1} parent=0 // pred_check_branch
    %23 = sbr.rel (%p21) target = $region25
  $region24: #{mlp_forward.1} parent=0 // pred_region
    %24 = vst [vmem:[#allocation2] sm:$0xff] 0.0
    %25 = vst [vmem:[#allocation2 + $0x8] sm:$0xff] 0.0
    %26 = vst [vmem:[#allocation2 + $0x10] sm:$0xff] 0.0
    %27 = vst [vmem:[#allocation2 + $0x18] sm:$0xff] 0.0
    %28 = vst [vmem:[#allocation2 + $0x20] sm:$0xff] 0.0
    %29 = vst [vmem:[#allocation2 + $0x28] sm:$0xff] 0.0
    %30 = vst [vmem:[#allocation2 + $0x30] sm:$0xff] 0.0
    %31 = vst [vmem:[#allocation2 + $0x38] sm:$0xff] 0.0
    %32 = vst [vmem:[#allocation2 + $0x40] sm:$0xff] 0.0
    %33 = vst [vmem:[#allocation2 + $0x48] sm:$0xff] 0.0
    %34 = vst [vmem:[#allocation2 + $0x50] sm:$0xff] 0.0
    %35 = vst [vmem:[#allocation2 + $0x58] sm:$0xff] 0.0
    %36 = vst [vmem:[#allocation2 + $0x60] sm:$0xff] 0.0
    %37 = vst [vmem:[#allocation2 + $0x68] sm:$0xff] 0.0
    %38 = vst [vmem:[#allocation2 + $0x70] sm:$0xff] 0.0
    %39 = vst [vmem:[#allocation2 + $0x78] sm:$0xff] 0.0
  $region25: #{mlp_forward.1} parent=0 // pred_fallthru
    _
  %v40 = vld [vmem:[%s0] sm:$0xff]
  %v41 = vld [vmem:[%s0 + $0x8] sm:$0xff]
  %v42 = vld [vmem:[%s0 + $0x10] sm:$0xff]
  %v43 = vld [vmem:[%s0 + $0x18] sm:$0xff]
  %v44 = vld [vmem:[%s0 + $0x20] sm:$0xff]
  %v45 = vld [vmem:[%s0 + $0x28] sm:$0xff]
  %v46 = vld [vmem:[%s0 + $0x30] sm:$0xff]
  %v47 = vld [vmem:[%s0 + $0x38] sm:$0xff]
  %v48 = vld [vmem:[%s0 + $0x40] sm:$0xff]
  %v49 = vld [vmem:[%s0 + $0x48] sm:$0xff]
  %v50 = vld [vmem:[%s0 + $0x50] sm:$0xff]
  %v51 = vld [vmem:[%s0 + $0x58] sm:$0xff]
  %v52 = vld [vmem:[%s0 + $0x60] sm:$0xff]
  %v53 = vld [vmem:[%s0 + $0x68] sm:$0xff]
  %v54 = vld [vmem:[%s0 + $0x70] sm:$0xff]
  %v55 = vld [vmem:[%s0 + $0x78] sm:$0xff]
  %v56 = vld [vmem:[%s1] sm:$0xff]
  %v57 = vld [vmem:[%s1 + $0x8] sm:$0xff]
  %v58 = vld [vmem:[%s1 + $0x10] sm:$0xff]
  %v59 = vld [vmem:[%s1 + $0x18] sm:$0xff]
  %v60 = vld [vmem:[%s1 + $0x20] sm:$0xff]
  %v61 = vld [vmem:[%s1 + $0x28] sm:$0xff]
  %v62 = vld [vmem:[%s1 + $0x30] sm:$0xff]
  %v63 = vld [vmem:[%s1 + $0x38] sm:$0xff]
  %v64 = vld [vmem:[%s1 + $0x40] sm:$0xff]
  %v65 = vld [vmem:[%s1 + $0x48] sm:$0xff]
  %v66 = vld [vmem:[%s1 + $0x50] sm:$0xff]
  %v67 = vld [vmem:[%s1 + $0x58] sm:$0xff]
  %v68 = vld [vmem:[%s1 + $0x60] sm:$0xff]
  %v69 = vld [vmem:[%s1 + $0x68] sm:$0xff]
  %v70 = vld [vmem:[%s1 + $0x70] sm:$0xff]
  %v71 = vld [vmem:[%s1 + $0x78] sm:$0xff]
  %v72 = vld [vmem:[%s2] sm:$0x1]
  %v74 = vlaneseq
  %v75 = vshrl.u32 %v74, 7
  %v76 = vsub.s32 0, %v75
  %v77 = vrot.slane %v72, %v76
  %79 = vmatprep.subr.mxu0 0.0
  %80 = vmatpush1.msra.mxu0 %v56
  %81 = vmatprep.subr.mxu0 0.0
  %82 = vmatpush1.msra.mxu0 %v57
  %83 = vmatprep.subr.mxu0 0.0
  %84 = vmatpush1.msra.mxu0 %v58
  %85 = vmatprep.subr.mxu0 0.0
  %86 = vmatpush1.msra.mxu0 %v59
  %87 = vmatprep.subr.mxu0 0.0
  %88 = vmatpush1.msra.mxu0 %v60
  %89 = vmatprep.subr.mxu0 0.0
  %90 = vmatpush1.msra.mxu0 %v61
  %91 = vmatprep.subr.mxu0 0.0
  %92 = vmatpush1.msra.mxu0 %v62
  %93 = vmatprep.subr.mxu0 0.0
  %94 = vmatpush1.msra.mxu0 %v63
  %95 = vmatprep.subr.mxu0 0.0
  %96 = vmatpush1.msra.mxu0 %v64
  %97 = vmatprep.subr.mxu0 0.0
  %98 = vmatpush1.msra.mxu0 %v65
  %99 = vmatprep.subr.mxu0 0.0
  %100 = vmatpush1.msra.mxu0 %v66
  %101 = vmatprep.subr.mxu0 0.0
  %102 = vmatpush1.msra.mxu0 %v67
  %103 = vmatprep.subr.mxu0 0.0
  %104 = vmatpush1.msra.mxu0 %v68
  %105 = vmatprep.subr.mxu0 0.0
  %106 = vmatpush1.msra.mxu0 %v69
  %107 = vmatprep.subr.mxu0 0.0
  %108 = vmatpush1.msra.mxu0 %v70
  %109 = vmatprep.subr.mxu0 0.0
  %110 = vmatpush1.msra.mxu0 %v71
  %111 = vmatprep.subr.mxu0 0.0
  %112 = vmatpush1.msra.mxu0 0.0
  %113 = vmatprep.subr.mxu0 0.0
  %114 = vmatpush1.msra.mxu0 0.0
  %115 = vmatprep.subr.mxu0 0.0
  %116 = vmatpush1.msra.mxu0 0.0
  %117 = vmatprep.subr.mxu0 0.0
  %118 = vmatpush1.msra.mxu0 0.0
  %119 = vmatprep.subr.mxu0 0.0
  %120 = vmatpush1.msra.mxu0 0.0
  %121 = vmatprep.subr.mxu0 0.0
  %122 = vmatpush1.msra.mxu0 0.0
  %123 = vmatprep.subr.mxu0 0.0
  %124 = vmatpush1.msra.mxu0 0.0
  %125 = vmatprep.subr.mxu0 0.0
  %126 = vmatpush1.msra.mxu0 0.0
  %127 = vmatprep.subr.mxu0 0.0
  %128 = vmatpush1.msra.mxu0 0.0
  %129 = vmatprep.subr.mxu0 0.0
  %130 = vmatpush1.msra.mxu0 0.0
  %131 = vmatprep.subr.mxu0 0.0
  %132 = vmatpush1.msra.mxu0 0.0
  %133 = vmatprep.subr.mxu0 0.0
  %134 = vmatpush1.msra.mxu0 0.0
  %135 = vmatprep.subr.mxu0 0.0
  %136 = vmatpush1.msra.mxu0 0.0
  %137 = vmatprep.subr.mxu0 0.0
  %138 = vmatpush1.msra.mxu0 0.0
  %139 = vmatprep.subr.mxu0 0.0
  %140 = vmatpush1.msra.mxu0 0.0
  %141 = vmatprep.subr.mxu0 0.0
  %142 = vmatpush1.msra.mxu0 0.0
  %143 = vmatprep.mubr.f32.mxu0 0.0
  %144 = vmatmul.mubr.f32.gmra.mrb[0].mxu0 %v40
  %v145 = vpop.f32.mrb[0].mxu0
  %v146 = vadd.f32 %v77, %v145
  %v147 = vpop.f32.mrb[0].mxu0
  %148 = vmatprep.mubr.f32.mxu0 0.0
  %149 = vmatmul.mubr.f32.gmra.mrb[0].mxu0 %v41
  %v150 = vpop.f32.mrb[0].mxu0
  %v151 = vadd.f32 %v77, %v150
  %v152 = vpop.f32.mrb[0].mxu0
  %153 = vmatprep.mubr.f32.mxu0 0.0
  %154 = vmatmul.mubr.f32.gmra.mrb[0].mxu0 %v42
  %v155 = vpop.f32.mrb[0].mxu0
  %v156 = vadd.f32 %v77, %v155
  %v157 = vpop.f32.mrb[0].mxu0
  %158 = vmatprep.mubr.f32.mxu0 0.0
  %159 = vmatmul.mubr.f32.gmra.mrb[0].mxu0 %v43
  %v160 = vpop.f32.mrb[0].mxu0
  %v161 = vadd.f32 %v77, %v160
  %v162 = vpop.f32.mrb[0].mxu0
  %163 = vmatprep.mubr.f32.mxu0 0.0
  %164 = vmatmul.mubr.f32.gmra.mrb[0].mxu0 %v44
  %v165 = vpop.f32.mrb[0].mxu0
  %v166 = vadd.f32 %v77, %v165
  %v167 = vpop.f32.mrb[0].mxu0
  %168 = vmatprep.mubr.f32.mxu0 0.0
  %169 = vmatmul.mubr.f32.gmra.mrb[0].mxu0 %v45
  %v170 = vpop.f32.mrb[0].mxu0
  %v171 = vadd.f32 %v77, %v170
  %v172 = vpop.f32.mrb[0].mxu0
  %173 = vmatprep.mubr.f32.mxu0 0.0
  %174 = vmatmul.mubr.f32.gmra.mrb[0].mxu0 %v46
  %v175 = vpop.f32.mrb[0].mxu0
  %v176 = vadd.f32 %v77, %v175
  %v177 = vpop.f32.mrb[0].mxu0
  %178 = vmatprep.mubr.f32.mxu0 0.0
  %179 = vmatmul.mubr.f32.gmra.mrb[0].mxu0 %v47
  %v180 = vpop.f32.mrb[0].mxu0
  %v181 = vadd.f32 %v77, %v180
  %v182 = vpop.f32.mrb[0].mxu0
  %183 = vmatprep.mubr.f32.mxu0 0.0
  %184 = vmatmul.mubr.f32.gmra.mrb[0].mxu0 %v48
  %v185 = vpop.f32.mrb[0].mxu0
  %v186 = vadd.f32 %v77, %v185
  %v187 = vpop.f32.mrb[0].mxu0
  %188 = vmatprep.mubr.f32.mxu0 0.0
  %189 = vmatmul.mubr.f32.gmra.mrb[0].mxu0 %v49
  %v190 = vpop.f32.mrb[0].mxu0
  %v191 = vadd.f32 %v77, %v190
  %v192 = vpop.f32.mrb[0].mxu0
  %193 = vmatprep.mubr.f32.mxu0 0.0
  %194 = vmatmul.mubr.f32.gmra.mrb[0].mxu0 %v50
  %v195 = vpop.f32.mrb[0].mxu0
  %v196 = vadd.f32 %v77, %v195
  %v197 = vpop.f32.mrb[0].mxu0
  %198 = vmatprep.mubr.f32.mxu0 0.0
  %199 = vmatmul.mubr.f32.gmra.mrb[0].mxu0 %v51
  %v200 = vpop.f32.mrb[0].mxu0
  %v201 = vadd.f32 %v77, %v200
  %v202 = vpop.f32.mrb[0].mxu0
  %203 = vmatprep.mubr.f32.mxu0 0.0
  %204 = vmatmul.mubr.f32.gmra.mrb[0].mxu0 %v52
  %v205 = vpop.f32.mrb[0].mxu0
  %v206 = vadd.f32 %v77, %v205
  %v207 = vpop.f32.mrb[0].mxu0
  %208 = vmatprep.mubr.f32.mxu0 0.0
  %209 = vmatmul.mubr.f32.gmra.mrb[0].mxu0 %v53
  %v210 = vpop.f32.mrb[0].mxu0
  %v211 = vadd.f32 %v77, %v210
  %v212 = vpop.f32.mrb[0].mxu0
  %213 = vmatprep.mubr.f32.mxu0 0.0
  %214 = vmatmul.mubr.f32.gmra.mrb[0].mxu0 %v54
  %v215 = vpop.f32.mrb[0].mxu0
  %v216 = vadd.f32 %v77, %v215
  %v217 = vpop.f32.mrb[0].mxu0
  %218 = vmatprep.mubr.f32.mxu0 0.0
  %219 = vmatmul.mubr.f32.gmra.mrb[0].mxu0 %v55
  %v220 = vpop.f32.mrb[0].mxu0
  %v221 = vadd.f32 %v77, %v220
  %v222 = vpop.f32.mrb[0].mxu0
  %223 = vdwg.mxu0
  %v224 = vmul.f32 %v146, 0.5
  %v225 = vmul.f32 %v151, 0.5
  %v226 = vmul.f32 %v156, 0.5
  %v227 = vmul.f32 %v161, 0.5
  %v228 = vmul.f32 %v166, 0.5
  %v229 = vmul.f32 %v171, 0.5
  %v230 = vmul.f32 %v176, 0.5
  %v231 = vmul.f32 %v181, 0.5
  %v232 = vmul.f32 %v186, 0.5
  %v233 = vmul.f32 %v191, 0.5
  %v234 = vmul.f32 %v196, 0.5
  %v235 = vmul.f32 %v201, 0.5
  %v236 = vmul.f32 %v206, 0.5
  %v237 = vmul.f32 %v211, 0.5
  %v238 = vmul.f32 %v216, 0.5
  %v239 = vmul.f32 %v221, 0.5
  %v240 = vmul.f32 %v146, 0.70710677
  %v241 = vmul.f32 %v151, 0.70710677
  %v242 = vmul.f32 %v156, 0.70710677
  %v243 = vmul.f32 %v161, 0.70710677
  %v244 = vmul.f32 %v166, 0.70710677
  %v245 = vmul.f32 %v171, 0.70710677
  %v246 = vmul.f32 %v176, 0.70710677
  %v247 = vmul.f32 %v181, 0.70710677
  %v248 = vmul.f32 %v186, 0.70710677
  %v249 = vmul.f32 %v191, 0.70710677
  %v250 = vmul.f32 %v196, 0.70710677
  %v251 = vmul.f32 %v201, 0.70710677
  %v252 = vmul.f32 %v206, 0.70710677
  %v253 = vmul.f32 %v211, 0.70710677
  %v254 = vmul.f32 %v216, 0.70710677
  %v255 = vmul.f32 %v221, 0.70710677
  %v256 = verf.f32.pop %v240
  %v257 = verf.f32.pop %v241
  %v258 = verf.f32.pop %v242
  %v259 = verf.f32.pop %v243
  %v260 = verf.f32.pop %v244
  %v261 = verf.f32.pop %v245
  %v262 = verf.f32.pop %v246
  %v263 = verf.f32.pop %v247
  %v264 = verf.f32.pop %v248
  %v265 = verf.f32.pop %v249
  %v266 = verf.f32.pop %v250
  %v267 = verf.f32.pop %v251
  %v268 = verf.f32.pop %v252
  %v269 = verf.f32.pop %v253
  %v270 = verf.f32.pop %v254
  %v271 = verf.f32.pop %v255
  %v272 = vadd.f32 %v256, 1.0
  %v273 = vadd.f32 %v257, 1.0
  %v274 = vadd.f32 %v258, 1.0
  %v275 = vadd.f32 %v259, 1.0
  %v276 = vadd.f32 %v260, 1.0
  %v277 = vadd.f32 %v261, 1.0
  %v278 = vadd.f32 %v262, 1.0
  %v279 = vadd.f32 %v263, 1.0
  %v280 = vadd.f32 %v264, 1.0
  %v281 = vadd.f32 %v265, 1.0
  %v282 = vadd.f32 %v266, 1.0
  %v283 = vadd.f32 %v267, 1.0
  %v284 = vadd.f32 %v268, 1.0
  %v285 = vadd.f32 %v269, 1.0
  %v286 = vadd.f32 %v270, 1.0
  %v287 = vadd.f32 %v271, 1.0
  %v288 = vmul.f32 %v224, %v272
  %v289 = vmul.f32 %v225, %v273
  %v290 = vmul.f32 %v226, %v274
  %v291 = vmul.f32 %v227, %v275
  %v292 = vmul.f32 %v228, %v276
  %v293 = vmul.f32 %v229, %v277
  %v294 = vmul.f32 %v230, %v278
  %v295 = vmul.f32 %v231, %v279
  %v296 = vmul.f32 %v232, %v280
  %v297 = vmul.f32 %v233, %v281
  %v298 = vmul.f32 %v234, %v282
  %v299 = vmul.f32 %v235, %v283
  %v300 = vmul.f32 %v236, %v284
  %v301 = vmul.f32 %v237, %v285
  %v302 = vmul.f32 %v238, %v286
  %v303 = vmul.f32 %v239, %v287
  %v304 = vld [vmem:[#allocation2] sm:$0xff]
  %v305 = vld [vmem:[#allocation2 + $0x8] sm:$0xff]
  %v306 = vld [vmem:[#allocation2 + $0x10] sm:$0xff]
  %v307 = vld [vmem:[#allocation2 + $0x18] sm:$0xff]
  %v308 = vld [vmem:[#allocation2 + $0x20] sm:$0xff]
  %v309 = vld [vmem:[#allocation2 + $0x28] sm:$0xff]
  %v310 = vld [vmem:[#allocation2 + $0x30] sm:$0xff]
  %v311 = vld [vmem:[#allocation2 + $0x38] sm:$0xff]
  %v312 = vld [vmem:[#allocation2 + $0x40] sm:$0xff]
  %v313 = vld [vmem:[#allocation2 + $0x48] sm:$0xff]
  %v314 = vld [vmem:[#allocation2 + $0x50] sm:$0xff]
  %v315 = vld [vmem:[#allocation2 + $0x58] sm:$0xff]
  %v316 = vld [vmem:[#allocation2 + $0x60] sm:$0xff]
  %v317 = vld [vmem:[#allocation2 + $0x68] sm:$0xff]
  %v318 = vld [vmem:[#allocation2 + $0x70] sm:$0xff]
  %v319 = vld [vmem:[#allocation2 + $0x78] sm:$0xff]
  %v320 = vld [vmem:[%s3] sm:$0xff]
  %v321 = vld [vmem:[%s3 + $0x8] sm:$0xff]
  %v322 = vld [vmem:[%s3 + $0x10] sm:$0xff]
  %v323 = vld [vmem:[%s3 + $0x18] sm:$0xff]
  %v324 = vld [vmem:[%s3 + $0x20] sm:$0xff]
  %v325 = vld [vmem:[%s3 + $0x28] sm:$0xff]
  %v326 = vld [vmem:[%s3 + $0x30] sm:$0xff]
  %v327 = vld [vmem:[%s3 + $0x38] sm:$0xff]
  %v328 = vld [vmem:[%s3 + $0x40] sm:$0xff]
  %v329 = vld [vmem:[%s3 + $0x48] sm:$0xff]
  %v330 = vld [vmem:[%s3 + $0x50] sm:$0xff]
  %v331 = vld [vmem:[%s3 + $0x58] sm:$0xff]
  %v332 = vld [vmem:[%s3 + $0x60] sm:$0xff]
  %v333 = vld [vmem:[%s3 + $0x68] sm:$0xff]
  %v334 = vld [vmem:[%s3 + $0x70] sm:$0xff]
  %v335 = vld [vmem:[%s3 + $0x78] sm:$0xff]
  %336 = vmatprep.subr.mxu0 0.0
  %337 = vmatpush1.msra.mxu0 %v320
  %338 = vmatprep.subr.mxu0 0.0
  %339 = vmatpush1.msra.mxu0 %v321
  %340 = vmatprep.subr.mxu0 0.0
  %341 = vmatpush1.msra.mxu0 %v322
  %342 = vmatprep.subr.mxu0 0.0
  %343 = vmatpush1.msra.mxu0 %v323
  %344 = vmatprep.subr.mxu0 0.0
  %345 = vmatpush1.msra.mxu0 %v324
  %346 = vmatprep.subr.mxu0 0.0
  %347 = vmatpush1.msra.mxu0 %v325
  %348 = vmatprep.subr.mxu0 0.0
  %349 = vmatpush1.msra.mxu0 %v326
  %350 = vmatprep.subr.mxu0 0.0
  %351 = vmatpush1.msra.mxu0 %v327
  %352 = vmatprep.subr.mxu0 0.0
  %353 = vmatpush1.msra.mxu0 %v328
  %354 = vmatprep.subr.mxu0 0.0
  %355 = vmatpush1.msra.mxu0 %v329
  %356 = vmatprep.subr.mxu0 0.0
  %357 = vmatpush1.msra.mxu0 %v330
  %358 = vmatprep.subr.mxu0 0.0
  %359 = vmatpush1.msra.mxu0 %v331
  %360 = vmatprep.subr.mxu0 0.0
  %361 = vmatpush1.msra.mxu0 %v332
  %362 = vmatprep.subr.mxu0 0.0
  %363 = vmatpush1.msra.mxu0 %v333
  %364 = vmatprep.subr.mxu0 0.0
  %365 = vmatpush1.msra.mxu0 %v334
  %366 = vmatprep.subr.mxu0 0.0
  %367 = vmatpush1.msra.mxu0 %v335
  %368 = vmatprep.subr.mxu0 0.0
  %369 = vmatpush1.msra.mxu0 0.0
  %370 = vmatprep.subr.mxu0 0.0
  %371 = vmatpush1.msra.mxu0 0.0
  %372 = vmatprep.subr.mxu0 0.0
  %373 = vmatpush1.msra.mxu0 0.0
  %374 = vmatprep.subr.mxu0 0.0
  %375 = vmatpush1.msra.mxu0 0.0
  %376 = vmatprep.subr.mxu0 0.0
  %377 = vmatpush1.msra.mxu0 0.0
  %378 = vmatprep.subr.mxu0 0.0
  %379 = vmatpush1.msra.mxu0 0.0
  %380 = vmatprep.subr.mxu0 0.0
  %381 = vmatpush1.msra.mxu0 0.0
  %382 = vmatprep.subr.mxu0 0.0
  %383 = vmatpush1.msra.mxu0 0.0
  %384 = vmatprep.subr.mxu0 0.0
  %385 = vmatpush1.msra.mxu0 0.0
  %386 = vmatprep.subr.mxu0 0.0
  %387 = vmatpush1.msra.mxu0 0.0
  %388 = vmatprep.subr.mxu0 0.0
  %389 = vmatpush1.msra.mxu0 0.0
  %390 = vmatprep.subr.mxu0 0.0
  %391 = vmatpush1.msra.mxu0 0.0
  %392 = vmatprep.subr.mxu0 0.0
  %393 = vmatpush1.msra.mxu0 0.0
  %394 = vmatprep.subr.mxu0 0.0
  %395 = vmatpush1.msra.mxu0 0.0
  %396 = vmatprep.subr.mxu0 0.0
  %397 = vmatpush1.msra.mxu0 0.0
  %398 = vmatprep.subr.mxu0 0.0
  %399 = vmatpush1.msra.mxu0 0.0
  %400 = vmatprep.mubr.f32.mxu0 0.0
  %401 = vmatmul.mubr.f32.gmra.mrb[0].mxu0 %v288
  %v402 = vpop.f32.mrb[0].mxu0
  %v403 = vadd.f32 0.0, %v402
  %v404 = vpop.f32.mrb[0].mxu0
  %405 = vmatprep.mubr.f32.mxu0 0.0
  %406 = vmatmul.mubr.f32.gmra.mrb[0].mxu0 %v289
  %v407 = vpop.f32.mrb[0].mxu0
  %v408 = vadd.f32 0.0, %v407
  %v409 = vpop.f32.mrb[0].mxu0
  %410 = vmatprep.mubr.f32.mxu0 0.0
  %411 = vmatmul.mubr.f32.gmra.mrb[0].mxu0 %v290
  %v412 = vpop.f32.mrb[0].mxu0
  %v413 = vadd.f32 0.0, %v412
  %v414 = vpop.f32.mrb[0].mxu0
  %415 = vmatprep.mubr.f32.mxu0 0.0
  %416 = vmatmul.mubr.f32.gmra.mrb[0].mxu0 %v291
  %v417 = vpop.f32.mrb[0].mxu0
  %v418 = vadd.f32 0.0, %v417
  %v419 = vpop.f32.mrb[0].mxu0
  %420 = vmatprep.mubr.f32.mxu0 0.0
  %421 = vmatmul.mubr.f32.gmra.mrb[0].mxu0 %v292
  %v422 = vpop.f32.mrb[0].mxu0
  %v423 = vadd.f32 0.0, %v422
  %v424 = vpop.f32.mrb[0].mxu0
  %425 = vmatprep.mubr.f32.mxu0 0.0
  %426 = vmatmul.mubr.f32.gmra.mrb[0].mxu0 %v293
  %v427 = vpop.f32.mrb[0].mxu0
  %v428 = vadd.f32 0.0, %v427
  %v429 = vpop.f32.mrb[0].mxu0
  %430 = vmatprep.mubr.f32.mxu0 0.0
  %431 = vmatmul.mubr.f32.gmra.mrb[0].mxu0 %v294
  %v432 = vpop.f32.mrb[0].mxu0
  %v433 = vadd.f32 0.0, %v432
  %v434 = vpop.f32.mrb[0].mxu0
  %435 = vmatprep.mubr.f32.mxu0 0.0
  %436 = vmatmul.mubr.f32.gmra.mrb[0].mxu0 %v295
  %v437 = vpop.f32.mrb[0].mxu0
  %v438 = vadd.f32 0.0, %v437
  %v439 = vpop.f32.mrb[0].mxu0
  %440 = vmatprep.mubr.f32.mxu0 0.0
  %441 = vmatmul.mubr.f32.gmra.mrb[0].mxu0 %v296
  %v442 = vpop.f32.mrb[0].mxu0
  %v443 = vadd.f32 0.0, %v442
  %v444 = vpop.f32.mrb[0].mxu0
  %445 = vmatprep.mubr.f32.mxu0 0.0
  %446 = vmatmul.mubr.f32.gmra.mrb[0].mxu0 %v297
  %v447 = vpop.f32.mrb[0].mxu0
  %v448 = vadd.f32 0.0, %v447
  %v449 = vpop.f32.mrb[0].mxu0
  %450 = vmatprep.mubr.f32.mxu0 0.0
  %451 = vmatmul.mubr.f32.gmra.mrb[0].mxu0 %v298
  %v452 = vpop.f32.mrb[0].mxu0
  %v453 = vadd.f32 0.0, %v452
  %v454 = vpop.f32.mrb[0].mxu0
  %455 = vmatprep.mubr.f32.mxu0 0.0
  %456 = vmatmul.mubr.f32.gmra.mrb[0].mxu0 %v299
  %v457 = vpop.f32.mrb[0].mxu0
  %v458 = vadd.f32 0.0, %v457
  %v459 = vpop.f32.mrb[0].mxu0
  %460 = vmatprep.mubr.f32.mxu0 0.0
  %461 = vmatmul.mubr.f32.gmra.mrb[0].mxu0 %v300
  %v462 = vpop.f32.mrb[0].mxu0
  %v463 = vadd.f32 0.0, %v462
  %v464 = vpop.f32.mrb[0].mxu0
  %465 = vmatprep.mubr.f32.mxu0 0.0
  %466 = vmatmul.mubr.f32.gmra.mrb[0].mxu0 %v301
  %v467 = vpop.f32.mrb[0].mxu0
  %v468 = vadd.f32 0.0, %v467
  %v469 = vpop.f32.mrb[0].mxu0
  %470 = vmatprep.mubr.f32.mxu0 0.0
  %471 = vmatmul.mubr.f32.gmra.mrb[0].mxu0 %v302
  %v472 = vpop.f32.mrb[0].mxu0
  %v473 = vadd.f32 0.0, %v472
  %v474 = vpop.f32.mrb[0].mxu0
  %475 = vmatprep.mubr.f32.mxu0 0.0
  %476 = vmatmul.mubr.f32.gmra.mrb[0].mxu0 %v303
  %v477 = vpop.f32.mrb[0].mxu0
  %v478 = vadd.f32 0.0, %v477
  %v479 = vpop.f32.mrb[0].mxu0
  %480 = vdwg.mxu0
  %v481 = vadd.f32 %v304, %v403
  %v482 = vadd.f32 %v305, %v408
  %v483 = vadd.f32 %v306, %v413
  %v484 = vadd.f32 %v307, %v418
  %v485 = vadd.f32 %v308, %v423
  %v486 = vadd.f32 %v309, %v428
  %v487 = vadd.f32 %v310, %v433
  %v488 = vadd.f32 %v311, %v438
  %v489 = vadd.f32 %v312, %v443
  %v490 = vadd.f32 %v313, %v448
  %v491 = vadd.f32 %v314, %v453
  %v492 = vadd.f32 %v315, %v458
  %v493 = vadd.f32 %v316, %v463
  %v494 = vadd.f32 %v317, %v468
  %v495 = vadd.f32 %v318, %v473
  %v496 = vadd.f32 %v319, %v478
  %497 = vst [vmem:[#allocation2] sm:$0xff] %v481
  %498 = vst [vmem:[#allocation2 + $0x8] sm:$0xff] %v482
  %499 = vst [vmem:[#allocation2 + $0x10] sm:$0xff] %v483
  %500 = vst [vmem:[#allocation2 + $0x18] sm:$0xff] %v484
  %501 = vst [vmem:[#allocation2 + $0x20] sm:$0xff] %v485
  %502 = vst [vmem:[#allocation2 + $0x28] sm:$0xff] %v486
  %503 = vst [vmem:[#allocation2 + $0x30] sm:$0xff] %v487
  %504 = vst [vmem:[#allocation2 + $0x38] sm:$0xff] %v488
  %505 = vst [vmem:[#allocation2 + $0x40] sm:$0xff] %v489
  %506 = vst [vmem:[#allocation2 + $0x48] sm:$0xff] %v490
  %507 = vst [vmem:[#allocation2 + $0x50] sm:$0xff] %v491
  %508 = vst [vmem:[#allocation2 + $0x58] sm:$0xff] %v492
  %509 = vst [vmem:[#allocation2 + $0x60] sm:$0xff] %v493
  %510 = vst [vmem:[#allocation2 + $0x68] sm:$0xff] %v494
  %511 = vst [vmem:[#allocation2 + $0x70] sm:$0xff] %v495
  %512 = vst [vmem:[#allocation2 + $0x78] sm:$0xff] %v496
  // Predicated region
  $region26: #{mlp_forward.1} parent=0 // pred_check
    %p513 = pneg %p20
  $region27: #{mlp_forward.1} parent=0 // pred_check_branch
    %515 = sbr.rel (%p513) target = $region29
  $region28: #{mlp_forward.1} parent=0 // pred_region
    %v516 = vld [vmem:[#allocation2] sm:$0xff]
    %v517 = vld [vmem:[#allocation2 + $0x8] sm:$0xff]
    %v518 = vld [vmem:[#allocation2 + $0x10] sm:$0xff]
    %v519 = vld [vmem:[#allocation2 + $0x18] sm:$0xff]
    %v520 = vld [vmem:[#allocation2 + $0x20] sm:$0xff]
    %v521 = vld [vmem:[#allocation2 + $0x28] sm:$0xff]
    %v522 = vld [vmem:[#allocation2 + $0x30] sm:$0xff]
    %v523 = vld [vmem:[#allocation2 + $0x38] sm:$0xff]
    %v524 = vld [vmem:[#allocation2 + $0x40] sm:$0xff]
    %v525 = vld [vmem:[#allocation2 + $0x48] sm:$0xff]
    %v526 = vld [vmem:[#allocation2 + $0x50] sm:$0xff]
    %v527 = vld [vmem:[#allocation2 + $0x58] sm:$0xff]
    %v528 = vld [vmem:[#allocation2 + $0x60] sm:$0xff]
    %v529 = vld [vmem:[#allocation2 + $0x68] sm:$0xff]
    %v530 = vld [vmem:[#allocation2 + $0x70] sm:$0xff]
    %v531 = vld [vmem:[#allocation2 + $0x78] sm:$0xff]
    %v532 = vld [vmem:[%s4] sm:$0x1]
    %v534 = vlaneseq
    %v535 = vshrl.u32 %v534, 7
    %v536 = vsub.s32 0, %v535
    %v537 = vrot.slane %v532, %v536
    %v539 = vadd.f32 %v516, %v537
    %v540 = vadd.f32 %v517, %v537
    %v541 = vadd.f32 %v518, %v537
    %v542 = vadd.f32 %v519, %v537
    %v543 = vadd.f32 %v520, %v537
    %v544 = vadd.f32 %v521, %v537
    %v545 = vadd.f32 %v522, %v537
    %v546 = vadd.f32 %v523, %v537
    %v547 = vadd.f32 %v524, %v537
    %v548 = vadd.f32 %v525, %v537
    %v549 = vadd.f32 %v526, %v537
    %v550 = vadd.f32 %v527, %v537
    %v551 = vadd.f32 %v528, %v537
    %v552 = vadd.f32 %v529, %v537
    %v553 = vadd.f32 %v530, %v537
    %v554 = vadd.f32 %v531, %v537
    %555 = vst [vmem:[%s5] sm:$0xff] %v539
    %556 = vst [vmem:[%s5 + $0x8] sm:$0xff] %v540
    %557 = vst [vmem:[%s5 + $0x10] sm:$0xff] %v541
    %558 = vst [vmem:[%s5 + $0x18] sm:$0xff] %v542
    %559 = vst [vmem:[%s5 + $0x20] sm:$0xff] %v543
    %560 = vst [vmem:[%s5 + $0x28] sm:$0xff] %v544
    %561 = vst [vmem:[%s5 + $0x30] sm:$0xff] %v545
    %562 = vst [vmem:[%s5 + $0x38] sm:$0xff] %v546
    %563 = vst [vmem:[%s5 + $0x40] sm:$0xff] %v547
    %564 = vst [vmem:[%s5 + $0x48] sm:$0xff] %v548
    %565 = vst [vmem:[%s5 + $0x50] sm:$0xff] %v549
    %566 = vst [vmem:[%s5 + $0x58] sm:$0xff] %v550
    %567 = vst [vmem:[%s5 + $0x60] sm:$0xff] %v551
    %568 = vst [vmem:[%s5 + $0x68] sm:$0xff] %v552
    %569 = vst [vmem:[%s5 + $0x70] sm:$0xff] %v553
    %570 = vst [vmem:[%s5 + $0x78] sm:$0xff] %v554
  $region29: #{mlp_forward.1} parent=0 // pred_fallthru
    _
  // Predicated region
  $region30: #{mlp_forward.1} parent=0 // pred_check
    _
  $region31: #{mlp_forward.1} parent=0 // pred_check_branch
    %572 = sbr.rel (0) target = $region33
  $region32: #{mlp_forward.1} parent=0 // pred_region
    _
  $region33: #{mlp_forward.1} parent=0 // pred_fallthru
    _
  // Predicated region
  $region34: #{mlp_forward.1} parent=0 // pred_check
    _
  $region35: #{mlp_forward.1} parent=0 // pred_check_branch
    %574 = sbr.rel (0) target = $region37
  $region36: #{mlp_forward.1} parent=0 // pred_region
    _
  $region37: #{mlp_forward.1} parent=0 // pred_fallthru
    _

</llo_original>
